<compile_context>
chip_gen: v5e
topology: v5e:2x2
jax: 0.10.0
libtpu: 0.0.40
codegen_flags: <defaults>
</compile_context>

<pallas_src>
import math

import jax
import jax.numpy as jnp
from jax.experimental import pallas as pl
from jax.experimental.pallas import tpu as pltpu


def _flatten_dma_kernel(x_hbm, o_hbm, sem):
    # Single direct HBM->HBM copy of the already-flattened (B, N) array.
    cp = pltpu.make_async_copy(x_hbm, o_hbm, sem)
    cp.start()
    cp.wait()


def flatten_pallas(x, *, materialize=True):
    """Pallas equivalent of Flatten.forward: x -> (B, prod(rest)).

    The flatten itself is metadata-only.  With materialize=False this returns
    the free reshaped view (exactly what PyTorch's .view does).  With
    materialize=True (default, so the demo actually runs a Pallas kernel) the
    flattened result is written to a fresh HBM buffer by one DMA descriptor.
    """
    B = x.shape[0]
    N = math.prod(x.shape[1:]) if x.ndim > 1 else 1

    # Metadata-only flatten (bitcast for contiguous / default-layout inputs).
    x2 = jnp.reshape(x, (B, N))
    if not materialize:
        return x2

    return pl.pallas_call(
        _flatten_dma_kernel,
        out_shape=jax.ShapeDtypeStruct((B, N), x.dtype),
        in_specs=[pl.BlockSpec(memory_space=pl.ANY)],
        out_specs=pl.BlockSpec(memory_space=pl.ANY),
        scratch_shapes=[pltpu.SemaphoreType.DMA(())],
        compiler_params=pltpu.CompilerParams(has_side_effects=True),
    )(x2)


if __name__ == "__main__":
    key = jax.random.PRNGKey(0)
    # Small image-like input consistent with a Flatten layer: (B, C, H, W).
    x = jax.random.normal(key, (2, 4, 16, 16), dtype=jnp.float32)

    y = flatten_pallas(x)
    y = jax.block_until_ready(y)

    # Reference: PyTorch's x.view(x.size(0), -1) == reshape(B, -1).
    y_ref = jnp.reshape(x, (x.shape[0], -1))
    assert y.shape == (2, 4 * 16 * 16), y.shape
    assert y.dtype == x.dtype
    assert bool(jnp.all(y == y_ref))

    print("KERNEL_OK")
</pallas_src>

<mosaic_0001>
module attributes {stable_mosaic.version = 11 : i64} {
  func.func @_flatten_dma_kernel(%arg0: memref<2x1024xf32, #tpu.memory_space<any>>, %arg1: memref<2x1024xf32, #tpu.memory_space<any>>, %arg2: memref<!tpu.dma_semaphore, #tpu.memory_space<semaphore_mem>>) attributes {dimension_semantics = [], scalar_prefetch = 0 : i64, scratch_operands = 1 : i64, tpu.core_type = #tpu.core_type<tc>} {
    tpu.enqueue_dma source(%arg0 : memref<2x1024xf32, #tpu.memory_space<any>>) target(%arg1 : memref<2x1024xf32, #tpu.memory_space<any>>) target_semaphore(%arg2 : memref<!tpu.dma_semaphore, #tpu.memory_space<semaphore_mem>>)
    tpu.wait_dma2 semaphore(%arg2 : memref<!tpu.dma_semaphore, #tpu.memory_space<semaphore_mem>>) src(%arg0 : memref<2x1024xf32, #tpu.memory_space<any>>) dst(%arg1 : memref<2x1024xf32, #tpu.memory_space<any>>)
    return
  }
}

</mosaic_0001>

<llo_original>
// kernel: tpu_custom_call.1
$region0: #{tpu_custom_call.1}
  #allocation0 [shape = 'u32[]', space=smem, size = 0x4, offset = 0x4, fixed_abs, tag = 'smem constant byte address 0x4 - core index']
  #allocation1 [shape = 'u32[72,128]{1,0:T(1,128)}', space=vmem, size = 0x9000, scoped, tag = 'internal scratch']
  #allocation2 [shape = 's32[1]{0}', space=sflag, size = 0x4, scoped, tag = 'scratch operand']
  #allocation3 [shape = 's32[]', space=sflag, size = 0x4, offset = 0, fixed_abs, tag = 'sflag constant byte address 0x0 - dummy sync flag']
  #allocation4 [shape = 'u32[0]{0}', space=smem, size = 0, offset = 0, fixed_abs, tag = 'smem constant byte address 0x0 - null']
  %s0 = inlined_call_operand.hbm [shape: f32[2,1024], index: 0, kind: input, shape index: {}]
  %s1 = inlined_call_operand.hbm [shape: f32[2,1024], index: 1, kind: output, shape index: {}]
  %s2 = sld [smem:[#allocation0]]
  $region2: #{tpu_custom_call.1} parent=0
    _
  %s4 = ssub.s32 1, %s2
  %s5 = scalar_select 0, %s4, %s2
  %s7 = sshll.u32 1, 14
  %s8 = sxor.u32 4294967295, %s7
  %s10 = sshll.u32 %s0, 4
  %s11 = int_to_ptr.hbm [resolvable:$true] %s10
  %s12 = sshll.u32 %s1, 4
  %s13 = int_to_ptr.hbm [resolvable:$true] %s12
  %16 = dma.general %s11, 256, %s13, [#allocation2], [#allocation3], [#allocation4], 0, 0
  %s17 = smul.u32 2, 1
  %s18 = smul.u32 %s17, 8
  %s19 = sshll.u32 %s18, 4
  %20 = dma.done [#allocation2], %s19
  %21 = vsyncmov [#allocation2]
  %s22 = vpop.sfrf %21
  %p23 = scmp.eq.s32.totalorder %s22, 0
  %p24 = pneg %p23
  %26 = shalt.err (%p24)

</llo_original>
